<compile_context>
chip_gen: v6e
topology: v6e:2x2x1
jax: 0.10.0
libtpu: 0.0.40
codegen_flags: <defaults>
</compile_context>

<pallas_src>
import functools

import jax
import jax.numpy as jnp
from jax.experimental import pallas as pl
from jax.experimental.pallas import tpu as pltpu


def _sepconv_kernel(img_ref, v_ref, h_ref, out_ref, *, K, H, W):
    # img_ref: (Ct, H+K-1, W+K-1)  v_ref/h_ref: (K, H, W)  out_ref: (Ct, H, W)
    f32 = jnp.float32

    # Hoist all filter-plane loads/casts out of the loops (K each, not K^2).
    vs = [v_ref[i].astype(f32) for i in range(K)]
    hs = [h_ref[j].astype(f32) for j in range(K)]

    acc = None
    # Outer loop over the horizontal offset j: one lane-shifted load of the
    # image slab per j; the inner i loop only takes sublane (H) slices.
    for j in range(K):
        col = img_ref[:, :, j:j + W].astype(f32)          # (Ct, H+K-1, W)
        inner = vs[0][None, :, :] * col[:, 0:H, :]
        for i in range(1, K):
            inner = inner + vs[i][None, :, :] * col[:, i:i + H, :]
        term = hs[j][None, :, :] * inner
        acc = term if acc is None else acc + term

    out_ref[...] = acc.astype(out_ref.dtype)


def _pick_c_tile(C, bytes_per_channel_block, budget_bytes=2 * 1024 * 1024):
    """Largest divisor of C whose per-step image block stays under `budget_bytes`."""
    for ct in range(C, 0, -1):
        if C % ct == 0 and ct * bytes_per_channel_block <= budget_bytes:
            return ct
    return 1


def separable_convolution(input_image, vertical, horizontal, c_tile=None):
    """Pallas TPU implementation of SeparableConvolution()(inputImage, vertical, horizontal)."""
    B, C, H_in, W_in = input_image.shape
    Bv, K, H, W = vertical.shape
    assert Bv == B and horizontal.shape == (B, K, H, W)
    assert H_in == H + K - 1 and W_in == W + K - 1

    itemsize = jnp.dtype(input_image.dtype).itemsize
    if c_tile is None:
        c_tile = _pick_c_tile(C, H_in * W_in * itemsize)
    assert C % c_tile == 0

    kernel = functools.partial(_sepconv_kernel, K=K, H=H, W=W)

    # Per-step working set (pipeline double-buffers inputs/outputs).
    blk_bytes = itemsize * (c_tile * H_in * W_in + 2 * K * H * W + c_tile * H * W)
    vmem_limit = int(min(32 * 1024 * 1024, max(4 * blk_bytes, 8 * 1024 * 1024)))

    flops = 2 * B * C * H * W * (K * K + K)
    bytes_accessed = itemsize * (
        B * C * H_in * W_in + 2 * B * K * H * W + B * C * H * W)

    return pl.pallas_call(
        kernel,
        out_shape=jax.ShapeDtypeStruct((B, C, H, W), input_image.dtype),
        grid_spec=pltpu.PrefetchScalarGridSpec(
            num_scalar_prefetch=0,
            grid=(B, C // c_tile),
            in_specs=[
                # (c_tile, H_in, W_in) image slab for batch b, channel block c
                pl.BlockSpec((None, c_tile, H_in, W_in), lambda b, c: (b, c, 0, 0)),
                # per-pixel vertical filters (shared across channels)
                pl.BlockSpec((None, K, H, W), lambda b, c: (b, 0, 0, 0)),
                # per-pixel horizontal filters (shared across channels)
                pl.BlockSpec((None, K, H, W), lambda b, c: (b, 0, 0, 0)),
            ],
            out_specs=pl.BlockSpec((None, c_tile, H, W), lambda b, c: (b, c, 0, 0)),
        ),
        compiler_params=pltpu.CompilerParams(
            dimension_semantics=("parallel", "parallel"),
            vmem_limit_bytes=vmem_limit),
        cost_estimate=pl.CostEstimate(
            flops=flops, transcendentals=0, bytes_accessed=bytes_accessed),
    )(input_image, vertical, horizontal)


def _sepconv_reference(img, v, h):
    """Plain-JAX reference for correctness checking."""
    B, C, H_in, W_in = img.shape
    _, K, H, W = v.shape
    out = jnp.zeros((B, C, H, W), jnp.float32)
    for i in range(K):
        for j in range(K):
            patch = img[:, :, i:i + H, j:j + W].astype(jnp.float32)
            out = out + patch * v[:, i][:, None, :, :] * h[:, j][:, None, :, :]
    return out


if __name__ == "__main__":
    # Small shapes consistent with the op: output 16x16, filter size K=5,
    # so the padded input image is (H+K-1, W+K-1) = 20x20.
    B, C, H, W, K = 2, 4, 16, 16, 5

    key = jax.random.PRNGKey(0)
    k1, k2, k3 = jax.random.split(key, 3)
    input_image = jax.random.normal(k1, (B, C, H + K - 1, W + K - 1), jnp.float32)
    vertical = jax.random.normal(k2, (B, K, H, W), jnp.float32)
    horizontal = jax.random.normal(k3, (B, K, H, W), jnp.float32)

    out = separable_convolution(input_image, vertical, horizontal)
    out = jax.block_until_ready(out)

    ref = _sepconv_reference(input_image, vertical, horizontal)
    assert out.shape == (B, C, H, W)
    assert jnp.allclose(out, ref, atol=1e-4, rtol=1e-4), "mismatch vs reference"

    print("KERNEL_OK")
</pallas_src>

<mosaic_0001>
module attributes {stable_mosaic.version = 11 : i64} {
  func.func @_sepconv_kernel(%arg0: i32, %arg1: i32, %arg2: memref<1x4x20x20xf32, #tpu.memory_space<vmem>>, %arg3: memref<1x5x16x16xf32, #tpu.memory_space<vmem>>, %arg4: memref<1x5x16x16xf32, #tpu.memory_space<vmem>>, %arg5: memref<1x4x16x16xf32, #tpu.memory_space<vmem>>) attributes {dimension_semantics = [#tpu.dimension_semantics<parallel>, #tpu.dimension_semantics<parallel>], iteration_bounds = array<i64: 2, 1>, scalar_prefetch = 0 : i64, scratch_operands = 0 : i64, tpu.core_type = #tpu.core_type<tc>, window_params = [{transform_indices = @transform_0, window_bounds = array<i64: 1, 4, 20, 20>}, {transform_indices = @transform_1, window_bounds = array<i64: 1, 5, 16, 16>}, {transform_indices = @transform_2, window_bounds = array<i64: 1, 5, 16, 16>}, {transform_indices = @transform_3, window_bounds = array<i64: 1, 4, 16, 16>}]} {
    %c0 = arith.constant 0 : index
    %c0_0 = arith.constant 0 : index
    %c0_1 = arith.constant 0 : index
    %c0_2 = arith.constant 0 : index
    %0 = vector.load %arg3[%c0, %c0_0, %c0_1, %c0_2] : memref<1x5x16x16xf32, #tpu.memory_space<vmem>>, vector<1x1x16x16xf32>
    %1 = vector.shape_cast %0 : vector<1x1x16x16xf32> to vector<16x16xf32>
    %c0_3 = arith.constant 0 : index
    %c1 = arith.constant 1 : index
    %c0_4 = arith.constant 0 : index
    %c0_5 = arith.constant 0 : index
    %2 = vector.load %arg3[%c0_3, %c1, %c0_4, %c0_5] : memref<1x5x16x16xf32, #tpu.memory_space<vmem>>, vector<1x1x16x16xf32>
    %3 = vector.shape_cast %2 : vector<1x1x16x16xf32> to vector<16x16xf32>
    %c0_6 = arith.constant 0 : index
    %c2 = arith.constant 2 : index
    %c0_7 = arith.constant 0 : index
    %c0_8 = arith.constant 0 : index
    %4 = vector.load %arg3[%c0_6, %c2, %c0_7, %c0_8] : memref<1x5x16x16xf32, #tpu.memory_space<vmem>>, vector<1x1x16x16xf32>
    %5 = vector.shape_cast %4 : vector<1x1x16x16xf32> to vector<16x16xf32>
    %c0_9 = arith.constant 0 : index
    %c3 = arith.constant 3 : index
    %c0_10 = arith.constant 0 : index
    %c0_11 = arith.constant 0 : index
    %6 = vector.load %arg3[%c0_9, %c3, %c0_10, %c0_11] : memref<1x5x16x16xf32, #tpu.memory_space<vmem>>, vector<1x1x16x16xf32>
    %7 = vector.shape_cast %6 : vector<1x1x16x16xf32> to vector<16x16xf32>
    %c0_12 = arith.constant 0 : index
    %c4 = arith.constant 4 : index
    %c0_13 = arith.constant 0 : index
    %c0_14 = arith.constant 0 : index
    %8 = vector.load %arg3[%c0_12, %c4, %c0_13, %c0_14] : memref<1x5x16x16xf32, #tpu.memory_space<vmem>>, vector<1x1x16x16xf32>
    %9 = vector.shape_cast %8 : vector<1x1x16x16xf32> to vector<16x16xf32>
    %c0_15 = arith.constant 0 : index
    %c0_16 = arith.constant 0 : index
    %c0_17 = arith.constant 0 : index
    %c0_18 = arith.constant 0 : index
    %10 = vector.load %arg4[%c0_15, %c0_16, %c0_17, %c0_18] : memref<1x5x16x16xf32, #tpu.memory_space<vmem>>, vector<1x1x16x16xf32>
    %11 = vector.shape_cast %10 : vector<1x1x16x16xf32> to vector<16x16xf32>
    %c0_19 = arith.constant 0 : index
    %c1_20 = arith.constant 1 : index
    %c0_21 = arith.constant 0 : index
    %c0_22 = arith.constant 0 : index
    %12 = vector.load %arg4[%c0_19, %c1_20, %c0_21, %c0_22] : memref<1x5x16x16xf32, #tpu.memory_space<vmem>>, vector<1x1x16x16xf32>
    %13 = vector.shape_cast %12 : vector<1x1x16x16xf32> to vector<16x16xf32>
    %c0_23 = arith.constant 0 : index
    %c2_24 = arith.constant 2 : index
    %c0_25 = arith.constant 0 : index
    %c0_26 = arith.constant 0 : index
    %14 = vector.load %arg4[%c0_23, %c2_24, %c0_25, %c0_26] : memref<1x5x16x16xf32, #tpu.memory_space<vmem>>, vector<1x1x16x16xf32>
    %15 = vector.shape_cast %14 : vector<1x1x16x16xf32> to vector<16x16xf32>
    %c0_27 = arith.constant 0 : index
    %c3_28 = arith.constant 3 : index
    %c0_29 = arith.constant 0 : index
    %c0_30 = arith.constant 0 : index
    %16 = vector.load %arg4[%c0_27, %c3_28, %c0_29, %c0_30] : memref<1x5x16x16xf32, #tpu.memory_space<vmem>>, vector<1x1x16x16xf32>
    %17 = vector.shape_cast %16 : vector<1x1x16x16xf32> to vector<16x16xf32>
    %c0_31 = arith.constant 0 : index
    %c4_32 = arith.constant 4 : index
    %c0_33 = arith.constant 0 : index
    %c0_34 = arith.constant 0 : index
    %18 = vector.load %arg4[%c0_31, %c4_32, %c0_33, %c0_34] : memref<1x5x16x16xf32, #tpu.memory_space<vmem>>, vector<1x1x16x16xf32>
    %19 = vector.shape_cast %18 : vector<1x1x16x16xf32> to vector<16x16xf32>
    %c0_35 = arith.constant 0 : index
    %c0_36 = arith.constant 0 : index
    %c0_37 = arith.constant 0 : index
    %c0_38 = arith.constant 0 : index
    %20 = vector.load %arg2[%c0_35, %c0_36, %c0_37, %c0_38] : memref<1x4x20x20xf32, #tpu.memory_space<vmem>>, vector<1x4x20x16xf32>
    %21 = vector.shape_cast %20 : vector<1x4x20x16xf32> to vector<4x20x16xf32>
    %22 = vector.shape_cast %1 : vector<16x16xf32> to vector<1x16x16xf32>
    %23 = vector.extract_strided_slice %21 {offsets = [0, 0, 0], sizes = [4, 16, 16], strides = [1, 1, 1]} : vector<4x20x16xf32> to vector<4x16x16xf32>
    %24 = vector.broadcast %22 : vector<1x16x16xf32> to vector<4x16x16xf32>
    %25 = arith.mulf %24, %23 : vector<4x16x16xf32>
    %26 = vector.shape_cast %3 : vector<16x16xf32> to vector<1x16x16xf32>
    %27 = vector.extract_strided_slice %21 {offsets = [0, 1, 0], sizes = [4, 16, 16], strides = [1, 1, 1]} : vector<4x20x16xf32> to vector<4x16x16xf32>
    %28 = vector.broadcast %26 : vector<1x16x16xf32> to vector<4x16x16xf32>
    %29 = arith.mulf %28, %27 : vector<4x16x16xf32>
    %30 = arith.addf %25, %29 : vector<4x16x16xf32>
    %31 = vector.shape_cast %5 : vector<16x16xf32> to vector<1x16x16xf32>
    %32 = vector.extract_strided_slice %21 {offsets = [0, 2, 0], sizes = [4, 16, 16], strides = [1, 1, 1]} : vector<4x20x16xf32> to vector<4x16x16xf32>
    %33 = vector.broadcast %31 : vector<1x16x16xf32> to vector<4x16x16xf32>
    %34 = arith.mulf %33, %32 : vector<4x16x16xf32>
    %35 = arith.addf %30, %34 : vector<4x16x16xf32>
    %36 = vector.shape_cast %7 : vector<16x16xf32> to vector<1x16x16xf32>
    %37 = vector.extract_strided_slice %21 {offsets = [0, 3, 0], sizes = [4, 16, 16], strides = [1, 1, 1]} : vector<4x20x16xf32> to vector<4x16x16xf32>
    %38 = vector.broadcast %36 : vector<1x16x16xf32> to vector<4x16x16xf32>
    %39 = arith.mulf %38, %37 : vector<4x16x16xf32>
    %40 = arith.addf %35, %39 : vector<4x16x16xf32>
    %41 = vector.shape_cast %9 : vector<16x16xf32> to vector<1x16x16xf32>
    %42 = vector.extract_strided_slice %21 {offsets = [0, 4, 0], sizes = [4, 16, 16], strides = [1, 1, 1]} : vector<4x20x16xf32> to vector<4x16x16xf32>
    %43 = vector.broadcast %41 : vector<1x16x16xf32> to vector<4x16x16xf32>
    %44 = arith.mulf %43, %42 : vector<4x16x16xf32>
    %45 = arith.addf %40, %44 : vector<4x16x16xf32>
    %46 = vector.shape_cast %11 : vector<16x16xf32> to vector<1x16x16xf32>
    %47 = vector.broadcast %46 : vector<1x16x16xf32> to vector<4x16x16xf32>
    %48 = arith.mulf %47, %45 : vector<4x16x16xf32>
    %c0_39 = arith.constant 0 : index
    %c0_40 = arith.constant 0 : index
    %c0_41 = arith.constant 0 : index
    %c1_42 = arith.constant 1 : index
    %49 = vector.load %arg2[%c0_39, %c0_40, %c0_41, %c1_42] : memref<1x4x20x20xf32, #tpu.memory_space<vmem>>, vector<1x4x20x16xf32>
    %50 = vector.shape_cast %49 : vector<1x4x20x16xf32> to vector<4x20x16xf32>
    %51 = vector.shape_cast %1 : vector<16x16xf32> to vector<1x16x16xf32>
    %52 = vector.extract_strided_slice %50 {offsets = [0, 0, 0], sizes = [4, 16, 16], strides = [1, 1, 1]} : vector<4x20x16xf32> to vector<4x16x16xf32>
    %53 = vector.broadcast %51 : vector<1x16x16xf32> to vector<4x16x16xf32>
    %54 = arith.mulf %53, %52 : vector<4x16x16xf32>
    %55 = vector.shape_cast %3 : vector<16x16xf32> to vector<1x16x16xf32>
    %56 = vector.extract_strided_slice %50 {offsets = [0, 1, 0], sizes = [4, 16, 16], strides = [1, 1, 1]} : vector<4x20x16xf32> to vector<4x16x16xf32>
    %57 = vector.broadcast %55 : vector<1x16x16xf32> to vector<4x16x16xf32>
    %58 = arith.mulf %57, %56 : vector<4x16x16xf32>
    %59 = arith.addf %54, %58 : vector<4x16x16xf32>
    %60 = vector.shape_cast %5 : vector<16x16xf32> to vector<1x16x16xf32>
    %61 = vector.extract_strided_slice %50 {offsets = [0, 2, 0], sizes = [4, 16, 16], strides = [1, 1, 1]} : vector<4x20x16xf32> to vector<4x16x16xf32>
    %62 = vector.broadcast %60 : vector<1x16x16xf32> to vector<4x16x16xf32>
    %63 = arith.mulf %62, %61 : vector<4x16x16xf32>
    %64 = arith.addf %59, %63 : vector<4x16x16xf32>
    %65 = vector.shape_cast %7 : vector<16x16xf32> to vector<1x16x16xf32>
    %66 = vector.extract_strided_slice %50 {offsets = [0, 3, 0], sizes = [4, 16, 16], strides = [1, 1, 1]} : vector<4x20x16xf32> to vector<4x16x16xf32>
    %67 = vector.broadcast %65 : vector<1x16x16xf32> to vector<4x16x16xf32>
    %68 = arith.mulf %67, %66 : vector<4x16x16xf32>
    %69 = arith.addf %64, %68 : vector<4x16x16xf32>
    %70 = vector.shape_cast %9 : vector<16x16xf32> to vector<1x16x16xf32>
    %71 = vector.extract_strided_slice %50 {offsets = [0, 4, 0], sizes = [4, 16, 16], strides = [1, 1, 1]} : vector<4x20x16xf32> to vector<4x16x16xf32>
    %72 = vector.broadcast %70 : vector<1x16x16xf32> to vector<4x16x16xf32>
    %73 = arith.mulf %72, %71 : vector<4x16x16xf32>
    %74 = arith.addf %69, %73 : vector<4x16x16xf32>
    %75 = vector.shape_cast %13 : vector<16x16xf32> to vector<1x16x16xf32>
    %76 = vector.broadcast %75 : vector<1x16x16xf32> to vector<4x16x16xf32>
    %77 = arith.mulf %76, %74 : vector<4x16x16xf32>
    %78 = arith.addf %48, %77 : vector<4x16x16xf32>
    %c0_43 = arith.constant 0 : index
    %c0_44 = arith.constant 0 : index
    %c0_45 = arith.constant 0 : index
    %c2_46 = arith.constant 2 : index
    %79 = vector.load %arg2[%c0_43, %c0_44, %c0_45, %c2_46] : memref<1x4x20x20xf32, #tpu.memory_space<vmem>>, vector<1x4x20x16xf32>
    %80 = vector.shape_cast %79 : vector<1x4x20x16xf32> to vector<4x20x16xf32>
    %81 = vector.shape_cast %1 : vector<16x16xf32> to vector<1x16x16xf32>
    %82 = vector.extract_strided_slice %80 {offsets = [0, 0, 0], sizes = [4, 16, 16], strides = [1, 1, 1]} : vector<4x20x16xf32> to vector<4x16x16xf32>
    %83 = vector.broadcast %81 : vector<1x16x16xf32> to vector<4x16x16xf32>
    %84 = arith.mulf %83, %82 : vector<4x16x16xf32>
    %85 = vector.shape_cast %3 : vector<16x16xf32> to vector<1x16x16xf32>
    %86 = vector.extract_strided_slice %80 {offsets = [0, 1, 0], sizes = [4, 16, 16], strides = [1, 1, 1]} : vector<4x20x16xf32> to vector<4x16x16xf32>
    %87 = vector.broadcast %85 : vector<1x16x16xf32> to vector<4x16x16xf32>
    %88 = arith.mulf %87, %86 : vector<4x16x16xf32>
    %89 = arith.addf %84, %88 : vector<4x16x16xf32>
    %90 = vector.shape_cast %5 : vector<16x16xf32> to vector<1x16x16xf32>
    %91 = vector.extract_strided_slice %80 {offsets = [0, 2, 0], sizes = [4, 16, 16], strides = [1, 1, 1]} : vector<4x20x16xf32> to vector<4x16x16xf32>
    %92 = vector.broadcast %90 : vector<1x16x16xf32> to vector<4x16x16xf32>
    %93 = arith.mulf %92, %91 : vector<4x16x16xf32>
    %94 = arith.addf %89, %93 : vector<4x16x16xf32>
    %95 = vector.shape_cast %7 : vector<16x16xf32> to vector<1x16x16xf32>
    %96 = vector.extract_strided_slice %80 {offsets = [0, 3, 0], sizes = [4, 16, 16], strides = [1, 1, 1]} : vector<4x20x16xf32> to vector<4x16x16xf32>
    %97 = vector.broadcast %95 : vector<1x16x16xf32> to vector<4x16x16xf32>
    %98 = arith.mulf %97, %96 : vector<4x16x16xf32>
    %99 = arith.addf %94, %98 : vector<4x16x16xf32>
    %100 = vector.shape_cast %9 : vector<16x16xf32> to vector<1x16x16xf32>
    %101 = vector.extract_strided_slice %80 {offsets = [0, 4, 0], sizes = [4, 16, 16], strides = [1, 1, 1]} : vector<4x20x16xf32> to vector<4x16x16xf32>
    %102 = vector.broadcast %100 : vector<1x16x16xf32> to vector<4x16x16xf32>
    %103 = arith.mulf %102, %101 : vector<4x16x16xf32>
    %104 = arith.addf %99, %103 : vector<4x16x16xf32>
    %105 = vector.shape_cast %15 : vector<16x16xf32> to vector<1x16x16xf32>
    %106 = vector.broadcast %105 : vector<1x16x16xf32> to vector<4x16x16xf32>
    %107 = arith.mulf %106, %104 : vector<4x16x16xf32>
    %108 = arith.addf %78, %107 : vector<4x16x16xf32>
    %c0_47 = arith.constant 0 : index
    %c0_48 = arith.constant 0 : index
    %c0_49 = arith.constant 0 : index
    %c3_50 = arith.constant 3 : index
    %109 = vector.load %arg2[%c0_47, %c0_48, %c0_49, %c3_50] : memref<1x4x20x20xf32, #tpu.memory_space<vmem>>, vector<1x4x20x16xf32>
    %110 = vector.shape_cast %109 : vector<1x4x20x16xf32> to vector<4x20x16xf32>
    %111 = vector.shape_cast %1 : vector<16x16xf32> to vector<1x16x16xf32>
    %112 = vector.extract_strided_slice %110 {offsets = [0, 0, 0], sizes = [4, 16, 16], strides = [1, 1, 1]} : vector<4x20x16xf32> to vector<4x16x16xf32>
    %113 = vector.broadcast %111 : vector<1x16x16xf32> to vector<4x16x16xf32>
    %114 = arith.mulf %113, %112 : vector<4x16x16xf32>
    %115 = vector.shape_cast %3 : vector<16x16xf32> to vector<1x16x16xf32>
    %116 = vector.extract_strided_slice %110 {offsets = [0, 1, 0], sizes = [4, 16, 16], strides = [1, 1, 1]} : vector<4x20x16xf32> to vector<4x16x16xf32>
    %117 = vector.broadcast %115 : vector<1x16x16xf32> to vector<4x16x16xf32>
    %118 = arith.mulf %117, %116 : vector<4x16x16xf32>
    %119 = arith.addf %114, %118 : vector<4x16x16xf32>
    %120 = vector.shape_cast %5 : vector<16x16xf32> to vector<1x16x16xf32>
    %121 = vector.extract_strided_slice %110 {offsets = [0, 2, 0], sizes = [4, 16, 16], strides = [1, 1, 1]} : vector<4x20x16xf32> to vector<4x16x16xf32>
    %122 = vector.broadcast %120 : vector<1x16x16xf32> to vector<4x16x16xf32>
    %123 = arith.mulf %122, %121 : vector<4x16x16xf32>
    %124 = arith.addf %119, %123 : vector<4x16x16xf32>
    %125 = vector.shape_cast %7 : vector<16x16xf32> to vector<1x16x16xf32>
    %126 = vector.extract_strided_slice %110 {offsets = [0, 3, 0], sizes = [4, 16, 16], strides = [1, 1, 1]} : vector<4x20x16xf32> to vector<4x16x16xf32>
    %127 = vector.broadcast %125 : vector<1x16x16xf32> to vector<4x16x16xf32>
    %128 = arith.mulf %127, %126 : vector<4x16x16xf32>
    %129 = arith.addf %124, %128 : vector<4x16x16xf32>
    %130 = vector.shape_cast %9 : vector<16x16xf32> to vector<1x16x16xf32>
    %131 = vector.extract_strided_slice %110 {offsets = [0, 4, 0], sizes = [4, 16, 16], strides = [1, 1, 1]} : vector<4x20x16xf32> to vector<4x16x16xf32>
    %132 = vector.broadcast %130 : vector<1x16x16xf32> to vector<4x16x16xf32>
    %133 = arith.mulf %132, %131 : vector<4x16x16xf32>
    %134 = arith.addf %129, %133 : vector<4x16x16xf32>
    %135 = vector.shape_cast %17 : vector<16x16xf32> to vector<1x16x16xf32>
    %136 = vector.broadcast %135 : vector<1x16x16xf32> to vector<4x16x16xf32>
    %137 = arith.mulf %136, %134 : vector<4x16x16xf32>
    %138 = arith.addf %108, %137 : vector<4x16x16xf32>
    %c0_51 = arith.constant 0 : index
    %c0_52 = arith.constant 0 : index
    %c0_53 = arith.constant 0 : index
    %c4_54 = arith.constant 4 : index
    %139 = vector.load %arg2[%c0_51, %c0_52, %c0_53, %c4_54] : memref<1x4x20x20xf32, #tpu.memory_space<vmem>>, vector<1x4x20x16xf32>
    %140 = vector.shape_cast %139 : vector<1x4x20x16xf32> to vector<4x20x16xf32>
    %141 = vector.shape_cast %1 : vector<16x16xf32> to vector<1x16x16xf32>
    %142 = vector.extract_strided_slice %140 {offsets = [0, 0, 0], sizes = [4, 16, 16], strides = [1, 1, 1]} : vector<4x20x16xf32> to vector<4x16x16xf32>
    %143 = vector.broadcast %141 : vector<1x16x16xf32> to vector<4x16x16xf32>
    %144 = arith.mulf %143, %142 : vector<4x16x16xf32>
    %145 = vector.shape_cast %3 : vector<16x16xf32> to vector<1x16x16xf32>
    %146 = vector.extract_strided_slice %140 {offsets = [0, 1, 0], sizes = [4, 16, 16], strides = [1, 1, 1]} : vector<4x20x16xf32> to vector<4x16x16xf32>
    %147 = vector.broadcast %145 : vector<1x16x16xf32> to vector<4x16x16xf32>
    %148 = arith.mulf %147, %146 : vector<4x16x16xf32>
    %149 = arith.addf %144, %148 : vector<4x16x16xf32>
    %150 = vector.shape_cast %5 : vector<16x16xf32> to vector<1x16x16xf32>
    %151 = vector.extract_strided_slice %140 {offsets = [0, 2, 0], sizes = [4, 16, 16], strides = [1, 1, 1]} : vector<4x20x16xf32> to vector<4x16x16xf32>
    %152 = vector.broadcast %150 : vector<1x16x16xf32> to vector<4x16x16xf32>
    %153 = arith.mulf %152, %151 : vector<4x16x16xf32>
    %154 = arith.addf %149, %153 : vector<4x16x16xf32>
    %155 = vector.shape_cast %7 : vector<16x16xf32> to vector<1x16x16xf32>
    %156 = vector.extract_strided_slice %140 {offsets = [0, 3, 0], sizes = [4, 16, 16], strides = [1, 1, 1]} : vector<4x20x16xf32> to vector<4x16x16xf32>
    %157 = vector.broadcast %155 : vector<1x16x16xf32> to vector<4x16x16xf32>
    %158 = arith.mulf %157, %156 : vector<4x16x16xf32>
    %159 = arith.addf %154, %158 : vector<4x16x16xf32>
    %160 = vector.shape_cast %9 : vector<16x16xf32> to vector<1x16x16xf32>
    %161 = vector.extract_strided_slice %140 {offsets = [0, 4, 0], sizes = [4, 16, 16], strides = [1, 1, 1]} : vector<4x20x16xf32> to vector<4x16x16xf32>
    %162 = vector.broadcast %160 : vector<1x16x16xf32> to vector<4x16x16xf32>
    %163 = arith.mulf %162, %161 : vector<4x16x16xf32>
    %164 = arith.addf %159, %163 : vector<4x16x16xf32>
    %165 = vector.shape_cast %19 : vector<16x16xf32> to vector<1x16x16xf32>
    %166 = vector.broadcast %165 : vector<1x16x16xf32> to vector<4x16x16xf32>
    %167 = arith.mulf %166, %164 : vector<4x16x16xf32>
    %168 = arith.addf %138, %167 : vector<4x16x16xf32>
    %c0_55 = arith.constant 0 : index
    %c0_56 = arith.constant 0 : index
    %c0_57 = arith.constant 0 : index
    %c0_58 = arith.constant 0 : index
    %169 = vector.load %arg5[%c0_55, %c0_56, %c0_57, %c0_58] : memref<1x4x16x16xf32, #tpu.memory_space<vmem>>, vector<1x4x16x16xf32>
    %170 = vector.shape_cast %169 : vector<1x4x16x16xf32> to vector<4x16x16xf32>
    %171 = vector.shape_cast %168 : vector<4x16x16xf32> to vector<1x4x16x16xf32>
    tpu.vector_store %arg5[%c0_55, %c0_56, %c0_57, %c0_58], %171 {strides = array<i32>} : memref<1x4x16x16xf32, #tpu.memory_space<vmem>>, vector<1x4x16x16xf32>,
    return
  }
  func.func @transform_0(%arg0: i32, %arg1: i32) -> (i32, i32, i32, i32) {
    %c0_i32 = arith.constant 0 : i32
    %c0_i32_0 = arith.constant 0 : i32
    %c0_i32_1 = arith.constant 0 : i32
    return %arg0, %arg1, %c0_i32, %c0_i32_0 : i32, i32, i32, i32
  }
  func.func @transform_1(%arg0: i32, %arg1: i32) -> (i32, i32, i32, i32) {
    %c0_i32 = arith.constant 0 : i32
    %c0_i32_0 = arith.constant 0 : i32
    %c0_i32_1 = arith.constant 0 : i32
    %c0_i32_2 = arith.constant 0 : i32
    return %arg0, %c0_i32, %c0_i32_0, %c0_i32_1 : i32, i32, i32, i32
  }
  func.func @transform_2(%arg0: i32, %arg1: i32) -> (i32, i32, i32, i32) {
    %c0_i32 = arith.constant 0 : i32
    %c0_i32_0 = arith.constant 0 : i32
    %c0_i32_1 = arith.constant 0 : i32
    %c0_i32_2 = arith.constant 0 : i32
    return %arg0, %c0_i32, %c0_i32_0, %c0_i32_1 : i32, i32, i32, i32
  }
  func.func @transform_3(%arg0: i32, %arg1: i32) -> (i32, i32, i32, i32) {
    %c0_i32 = arith.constant 0 : i32
    %c0_i32_0 = arith.constant 0 : i32
    %c0_i32_1 = arith.constant 0 : i32
    return %arg0, %arg1, %c0_i32, %c0_i32_0 : i32, i32, i32, i32
  }
}

</mosaic_0001>

<llo_original>
// kernel: tpu_custom_call.1
$region0: #{tpu_custom_call.1}
  #allocation0 [shape = 'u32[]', space=smem, size = 0x4, offset = 0x4, fixed_abs, tag = 'smem constant byte address 0x4 - core index']
  #allocation1 [shape = 'u32[144,128]{1,0:T(1,128)}', space=vmem, size = 0x12000, scoped, tag = 'internal scratch']
  %s0 = inlined_call_operand.vmem [shape: f32[2,4,20,20], index: 0, kind: input, shape index: {}]
  %s1 = inlined_call_operand.vmem [shape: f32[2,5,16,16], index: 1, kind: input, shape index: {}]
  %s2 = inlined_call_operand.vmem [shape: f32[2,5,16,16], index: 2, kind: input, shape index: {}]
  %s3 = inlined_call_operand.hbm [shape: f32[2,4,16,16], index: 3, kind: output, shape index: {}]
  %s4 = sld [smem:[#allocation0]]
  $region45: #{tpu_custom_call.1} parent=0
    _
  %s6 = ssub.s32 1, %s4
  %s7 = scalar_select 0, %s6, %s4
  $region1: #{tpu_custom_call.1} parent=0
    #allocation2 [shape = 'u8[65536]{0}', space=vmem, size = 0x10000, scoped, tag = 'output window, operand 0']
    #allocation3 [shape = 's32[2]{0}', space=sflag, size = 0x8, scoped, tag = 'scoped memory for tpu_custom_call.1']
    %8 = vsyncpa [#allocation3], 0
    %s9 = scalar_lea.sflag [#allocation3], 1
    %10 = vsyncpa %s9, 0
    loop: start=0, step=1, limit=4
    $region2: #{tpu_custom_call.1} parent=1 // loop_pre_header
      _
    $region3: #{tpu_custom_call.1} parent=1 // loop_header
      %s12 = sphi 0, %s16
      %p13 = scmp.ge.s32.totalorder %s12, 4
      %s19 = sphi 0, %s31
      %s20 = sphi 0, %s27
      %s21 = sphi 0, %s19
      %s22 = sphi 0, %s20
      %s23 = sphi 0, %s21
      %s24 = sphi 0, %s22
      %s36 = sphi 0, %s38
      %s39 = sphi 0, %s36
      %s40 = sphi 0, %s39
      %s56 = sphi 0, %s40
      %s62 = sphi 0, %s64
      %s65 = sphi 0, %s62
      %s66 = sphi 0, %s65
      %s82 = sphi 0, %s66
      %s88 = sphi 0, %s90
      %s91 = sphi 0, %s88
      %s92 = sphi 0, %s91
      %s108 = sphi 0, %s92
      %s116 = sphi 0, %s118
      %s119 = sphi 0, %s116
      %s120 = sphi 0, %s119
      %s136 = sphi 0, %s120
    $region4: #{tpu_custom_call.1} parent=1 // loop_header_branch
      %15 = sbr.rel (%p13) target = $region8
    $region5: #{tpu_custom_call.1} parent=1 // loop_body
      %s17 = ssub.s32 %s12, 1
      %s18 = ssub.s32 %s12, 2
      %s25 = sadd.s32 1, %s20
      %p26 = scmp.ge.s32.totalorder %s25, 1
      %s27 = scalar_select %p26, 0, %s25
      %s28 = sadd.s32 1, %s19
      %s29 = scalar_select %p26, %s28, %s19
      %p30 = scmp.ge.s32.totalorder %s29, 2
      %s31 = scalar_select %p30, 0, %s29
      %s32 = ssub.s32 %s19, %s31
      %s33 = ssub.s32 %s20, %s27
      %s34 = sor.u32 %s32, %s33
      %p35 = scmp.eq.s32.totalorder %s34, 0
      %s37 = sadd.s32 %s36, 1
      %s38 = scalar_select %p35, %s36, %s37
      %p41 = pneg %p35
      %p42 = scmp.eq.s32.totalorder %s12, 1
      %p43 = por %p41, %p42
      %p44 = scmp.ne.s32.totalorder %s36, %s39
      %p45 = scmp.eq.s32.totalorder %s12, 0
      %p46 = por %p44, %p45
      %p47 = scmp.ne.s32.totalorder %s36, %s39
      %p48 = scmp.eq.s32.totalorder %s17, 1
      %p49 = por %p47, %p48
      %p50 = scmp.ne.s32.totalorder %s39, %s40
      %p51 = scmp.eq.s32.totalorder %s17, 0
      %p52 = por %p50, %p51
      %p53 = scmp.ne.s32.totalorder %s39, %s40
      %p54 = scmp.eq.s32.totalorder %s18, 1
      %p55 = por %p53, %p54
      %p57 = scmp.ne.s32.totalorder %s40, %s56
      %p58 = scmp.eq.s32.totalorder %s18, 0
      %p59 = por %p57, %p58
      %s60 = ssub.s32 %s19, %s31
      %p61 = scmp.eq.s32.totalorder %s60, 0
      %s63 = sadd.s32 %s62, 1
      %s64 = scalar_select %p61, %s62, %s63
      %p67 = pneg %p61
      %p68 = scmp.eq.s32.totalorder %s12, 1
      %p69 = por %p67, %p68
      %p70 = scmp.ne.s32.totalorder %s62, %s65
      %p71 = scmp.eq.s32.totalorder %s12, 0
      %p72 = por %p70, %p71
      %p73 = scmp.ne.s32.totalorder %s62, %s65
      %p74 = scmp.eq.s32.totalorder %s17, 1
      %p75 = por %p73, %p74
      %p76 = scmp.ne.s32.totalorder %s65, %s66
      %p77 = scmp.eq.s32.totalorder %s17, 0
      %p78 = por %p76, %p77
      %p79 = scmp.ne.s32.totalorder %s65, %s66
      %p80 = scmp.eq.s32.totalorder %s18, 1
      %p81 = por %p79, %p80
      %p83 = scmp.ne.s32.totalorder %s66, %s82
      %p84 = scmp.eq.s32.totalorder %s18, 0
      %p85 = por %p83, %p84
      %s86 = ssub.s32 %s19, %s31
      %p87 = scmp.eq.s32.totalorder %s86, 0
      %s89 = sadd.s32 %s88, 1
      %s90 = scalar_select %p87, %s88, %s89
      %p93 = pneg %p87
      %p94 = scmp.eq.s32.totalorder %s12, 1
      %p95 = por %p93, %p94
      %p96 = scmp.ne.s32.totalorder %s88, %s91
      %p97 = scmp.eq.s32.totalorder %s12, 0
      %p98 = por %p96, %p97
      %p99 = scmp.ne.s32.totalorder %s88, %s91
      %p100 = scmp.eq.s32.totalorder %s17, 1
      %p101 = por %p99, %p100
      %p102 = scmp.ne.s32.totalorder %s91, %s92
      %p103 = scmp.eq.s32.totalorder %s17, 0
      %p104 = por %p102, %p103
      %p105 = scmp.ne.s32.totalorder %s91, %s92
      %p106 = scmp.eq.s32.totalorder %s18, 1
      %p107 = por %p105, %p106
      %p109 = scmp.ne.s32.totalorder %s92, %s108
      %p110 = scmp.eq.s32.totalorder %s18, 0
      %p111 = por %p109, %p110
      %s112 = ssub.s32 %s19, %s31
      %s113 = ssub.s32 %s20, %s27
      %s114 = sor.u32 %s112, %s113
      %p115 = scmp.eq.s32.totalorder %s114, 0
      %s117 = sadd.s32 %s116, 1
      %s118 = scalar_select %p115, %s116, %s117
      %p121 = pneg %p115
      %p122 = scmp.eq.s32.totalorder %s12, 1
      %p123 = por %p121, %p122
      %p124 = scmp.ne.s32.totalorder %s116, %s119
      %p125 = scmp.eq.s32.totalorder %s12, 0
      %p126 = por %p124, %p125
      %p127 = scmp.ne.s32.totalorder %s116, %s119
      %p128 = scmp.eq.s32.totalorder %s17, 1
      %p129 = por %p127, %p128
      %p130 = scmp.ne.s32.totalorder %s119, %s120
      %p131 = scmp.eq.s32.totalorder %s17, 0
      %p132 = por %p130, %p131
      %p133 = scmp.ne.s32.totalorder %s119, %s120
      %p134 = scmp.eq.s32.totalorder %s18, 1
      %p135 = por %p133, %p134
      %p137 = scmp.ne.s32.totalorder %s120, %s136
      %p138 = scmp.eq.s32.totalorder %s18, 0
      %p139 = por %p137, %p138
      %p140 = scmp.le.s32.totalorder 1, %s12
      %p141 = scmp.lt.s32.totalorder %s12, 3
      %p142 = pnand %p140, %p141
      %p143 = pneg %p142
      // Predicated region
      $region9: #{tpu_custom_call.1} parent=5 // pred_check
        _
      $region10: #{tpu_custom_call.1} parent=5 // pred_check_branch
        %145 = sbr.rel (%p142) target = $region12
      $region11: #{tpu_custom_call.1} parent=5 // pred_region
        %s146 = ssub.s32 %s12, 1
      $region12: #{tpu_custom_call.1} parent=5 // pred_fallthru
        _
      %p147 = scmp.lt.s32.totalorder %s12, 2
      // Predicated region
      $region13: #{tpu_custom_call.1} parent=5 // pred_check
        %p148 = pneg %p147
      $region14: #{tpu_custom_call.1} parent=5 // pred_check_branch
        %150 = sbr.rel (%p148) target = $region16
      $region15: #{tpu_custom_call.1} parent=5 // pred_region
        // Predicated region
        $region17: #{tpu_custom_call.1} parent=15 // pred_check
          %p151 = pneg %p46
        $region18: #{tpu_custom_call.1} parent=15 // pred_check_branch
          %153 = sbr.rel (%p151) target = $region20
        $region19: #{tpu_custom_call.1} parent=15 // pred_region
          %s154 = smul.u32 4, %s20
          %p155 = scmp.lt.s32.totalorder %s19, 1
          %s156 = scalar_select %p155, %s19, 1
          %p157 = scmp.lt.s32.totalorder %s154, 3
          %s158 = scalar_select %p157, %s154, 3
          %s159 = smul.addr %s158, 3
          %s160 = smul.addr %s156, 12
          %s161 = sadd.s32 %s159, %s160
          %s162 = smul.addr %s161, 8
          %s163 = scalar_lea.vmem %s0, %s162
          %s164 = smul.u32 4, %s20
        $region20: #{tpu_custom_call.1} parent=15 // pred_fallthru
          _
        // Predicated region
        $region21: #{tpu_custom_call.1} parent=15 // pred_check
          %p165 = pneg %p72
        $region22: #{tpu_custom_call.1} parent=15 // pred_check_branch
          %167 = sbr.rel (%p165) target = $region24
        $region23: #{tpu_custom_call.1} parent=15 // pred_region
          %p168 = scmp.lt.s32.totalorder %s19, 1
          %s169 = scalar_select %p168, %s19, 1
          %s170 = smul.addr %s169, 10
          %s171 = smul.addr %s170, 8
          %s172 = scalar_lea.vmem %s1, %s171
        $region24: #{tpu_custom_call.1} parent=15 // pred_fallthru
          _
        // Predicated region
        $region25: #{tpu_custom_call.1} parent=15 // pred_check
          %p173 = pneg %p98
        $region26: #{tpu_custom_call.1} parent=15 // pred_check_branch
          %175 = sbr.rel (%p173) target = $region28
        $region27: #{tpu_custom_call.1} parent=15 // pred_region
          %p176 = scmp.lt.s32.totalorder %s19, 1
          %s177 = scalar_select %p176, %s19, 1
          %s178 = smul.addr %s177, 10
          %s179 = smul.addr %s178, 8
          %s180 = scalar_lea.vmem %s2, %s179
        $region28: #{tpu_custom_call.1} parent=15 // pred_fallthru
          _
      $region16: #{tpu_custom_call.1} parent=5 // pred_fallthru
        _
      %p181 = scmp.le.s32.totalorder 1, %s12
      %p182 = scmp.lt.s32.totalorder %s12, 3
      %p183 = pnand %p181, %p182
      %p184 = pneg %p183
      // Predicated region
      $region29: #{tpu_custom_call.1} parent=5 // pred_check
        _
      $region30: #{tpu_custom_call.1} parent=5 // pred_check_branch
        %186 = sbr.rel (%p183) target = $region32
      $region31: #{tpu_custom_call.1} parent=5 // pred_region
        %s187 = ssub.s32 %s12, 1
        %s188 = smul.u32 4, %s22
        %p189 = scmp.lt.s32.totalorder %s21, 1
        %s190 = scalar_select %p189, %s21, 1
        %p191 = scmp.lt.s32.totalorder %s188, 3
        %s192 = scalar_select %p191, %s188, 3
        %s193 = smul.addr %s192, 3
        %s194 = smul.addr %s190, 12
        %s195 = sadd.s32 %s193, %s194
        %s196 = smul.addr %s195, 8
        %s197 = scalar_lea.vmem %s0, %s196
        %p198 = pneg %p52
        %p199 = pneg %p49
        %p200 = scmp.lt.s32.totalorder %s21, 1
        %s201 = scalar_select %p200, %s21, 1
        %s202 = smul.addr %s201, 10
        %s203 = smul.addr %s202, 8
        %s204 = scalar_lea.vmem %s1, %s203
        %p205 = pneg %p78
        %p206 = pneg %p75
        %p207 = scmp.lt.s32.totalorder %s21, 1
        %s208 = scalar_select %p207, %s21, 1
        %s209 = smul.addr %s208, 10
        %s210 = smul.addr %s209, 8
        %s211 = scalar_lea.vmem %s2, %s210
        %p212 = pneg %p104
        %p213 = pneg %p101
        %p214 = pneg %p132
        %p215 = pneg %p129
        %s216 = sand.u32 %s119, 1
        %s217 = scalar_lea.sflag [#allocation3], %s216
        %s218 = sand.u32 %s119, 1
        %s219 = smul.addr %s218, 64
        %s220 = scalar_lea.vmem [#allocation2], %s219
        %s221 = smul.u32 4, %s22
        %p222 = scmp.lt.s32.totalorder %s21, 1
        %s223 = scalar_select %p222, %s21, 1
        %p224 = scmp.lt.s32.totalorder %s221, 3
        %s225 = scalar_select %p224, %s221, 3
        %s226 = smul.addr %s225, 3
        %s227 = smul.addr %s223, 12
        %s228 = sadd.s32 %s226, %s227
        %s229 = smul.addr %s228, 8
        %s230 = scalar_lea.vmem %s0, %s229
        %s231 = smul.u32 4, %s22
        %p232 = scmp.lt.s32.totalorder %s21, 1
        %s233 = scalar_select %p232, %s21, 1
        %s234 = smul.addr %s233, 10
        %s235 = smul.addr %s234, 8
        %s236 = scalar_lea.vmem %s1, %s235
        %p237 = scmp.lt.s32.totalorder %s21, 1
        %s238 = scalar_select %p237, %s21, 1
        %s239 = smul.addr %s238, 10
        %s240 = smul.addr %s239, 8
        %s241 = scalar_lea.vmem %s2, %s240
        %s242 = smul.u32 4, %s22
        %v243 = vld [vmem:[%s236] sm:$0xff]
        %v244 = vld [vmem:[%s236 + $0x8] sm:$0xff]
        %s245 = scalar_lea.vmem %s236, 16
        %v246 = vld [vmem:[%s245] sm:$0xff]
        %v247 = vld [vmem:[%s245 + $0x8] sm:$0xff]
        %s248 = scalar_lea.vmem %s236, 32
        %v249 = vld [vmem:[%s248] sm:$0xff]
        %v250 = vld [vmem:[%s248 + $0x8] sm:$0xff]
        %s251 = scalar_lea.vmem %s236, 48
        %v252 = vld [vmem:[%s251] sm:$0xff]
        %v253 = vld [vmem:[%s251 + $0x8] sm:$0xff]
        %s254 = scalar_lea.vmem %s236, 64
        %v255 = vld [vmem:[%s254] sm:$0xff]
        %v256 = vld [vmem:[%s254 + $0x8] sm:$0xff]
        %v257 = vld [vmem:[%s241] sm:$0xff]
        %v258 = vld [vmem:[%s241 + $0x8] sm:$0xff]
        %s259 = scalar_lea.vmem %s241, 16
        %v260 = vld [vmem:[%s259] sm:$0xff]
        %v261 = vld [vmem:[%s259 + $0x8] sm:$0xff]
        %s262 = scalar_lea.vmem %s241, 32
        %v263 = vld [vmem:[%s262] sm:$0xff]
        %v264 = vld [vmem:[%s262 + $0x8] sm:$0xff]
        %s265 = scalar_lea.vmem %s241, 48
        %v266 = vld [vmem:[%s265] sm:$0xff]
        %v267 = vld [vmem:[%s265 + $0x8] sm:$0xff]
        %s268 = scalar_lea.vmem %s241, 64
        %v269 = vld [vmem:[%s268] sm:$0xff]
        %v270 = vld [vmem:[%s268 + $0x8] sm:$0xff]
        %v271 = vld [vmem:[%s230] sm:$0xff]
        %v272 = vld [vmem:[%s230 + $0x8] sm:$0xff]
        %v273 = vld [vmem:[%s230 + $0x10] sm:$0xf]
        %v274 = vld [vmem:[%s230 + $0x18] sm:$0xff]
        %v275 = vld [vmem:[%s230 + $0x20] sm:$0xff]
        %v276 = vld [vmem:[%s230 + $0x28] sm:$0xf]
        %v277 = vld [vmem:[%s230 + $0x30] sm:$0xff]
        %v278 = vld [vmem:[%s230 + $0x38] sm:$0xff]
        %v279 = vld [vmem:[%s230 + $0x40] sm:$0xf]
        %v280 = vld [vmem:[%s230 + $0x48] sm:$0xff]
        %v281 = vld [vmem:[%s230 + $0x50] sm:$0xff]
        %v282 = vld [vmem:[%s230 + $0x58] sm:$0xf]
        %v283 = vmul.f32 %v243, %v271
        %v284 = vmul.f32 %v244, %v272
        %v285 = vmul.f32 %v243, %v274
        %v286 = vmul.f32 %v244, %v275
        %v287 = vmul.f32 %v243, %v277
        %v288 = vmul.f32 %v244, %v278
        %v289 = vmul.f32 %v243, %v280
        %v290 = vmul.f32 %v244, %v281
        %vm303 = vcmask 1046528
        %v304 = vrot.slane %v271, 1
        %v305 = vrot.slane %v272, 1
        %v306 = vsel %vm303, %v304, %v305
        %v307 = vrot.slane %v273, 1
        %v308 = vsel %vm303, %v305, %v307
        %v309 = vrot.slane %v274, 1
        %v310 = vrot.slane %v275, 1
        %v311 = vsel %vm303, %v309, %v310
        %v312 = vrot.slane %v276, 1
        %v313 = vsel %vm303, %v310, %v312
        %v314 = vrot.slane %v277, 1
        %v315 = vrot.slane %v278, 1
        %v316 = vsel %vm303, %v314, %v315
        %v317 = vrot.slane %v279, 1
        %v318 = vsel %vm303, %v315, %v317
        %v319 = vrot.slane %v280, 1
        %v320 = vrot.slane %v281, 1
        %v321 = vsel %vm303, %v319, %v320
        %v322 = vrot.slane %v282, 1
        %v323 = vsel %vm303, %v320, %v322
        %v332 = vmul.f32 %v246, %v306
        %v333 = vmul.f32 %v247, %v308
        %v334 = vmul.f32 %v246, %v311
        %v335 = vmul.f32 %v247, %v313
        %v336 = vmul.f32 %v246, %v316
        %v337 = vmul.f32 %v247, %v318
        %v338 = vmul.f32 %v246, %v321
        %v339 = vmul.f32 %v247, %v323
        %v340 = vadd.f32 %v283, %v332
        %v341 = vadd.f32 %v284, %v333
        %v342 = vadd.f32 %v285, %v334
        %v343 = vadd.f32 %v286, %v335
        %v344 = vadd.f32 %v287, %v336
        %v345 = vadd.f32 %v288, %v337
        %v346 = vadd.f32 %v289, %v338
        %v347 = vadd.f32 %v290, %v339
        %vm348 = vcmask 1045504
        %v349 = vrot.slane %v271, 2
        %v350 = vrot.slane %v272, 2
        %v351 = vsel %vm348, %v349, %v350
        %v352 = vrot.slane %v273, 2
        %v353 = vsel %vm348, %v350, %v352
        %v354 = vrot.slane %v274, 2
        %v355 = vrot.slane %v275, 2
        %v356 = vsel %vm348, %v354, %v355
        %v357 = vrot.slane %v276, 2
        %v358 = vsel %vm348, %v355, %v357
        %v359 = vrot.slane %v277, 2
        %v360 = vrot.slane %v278, 2
        %v361 = vsel %vm348, %v359, %v360
        %v362 = vrot.slane %v279, 2
        %v363 = vsel %vm348, %v360, %v362
        %v364 = vrot.slane %v280, 2
        %v365 = vrot.slane %v281, 2
        %v366 = vsel %vm348, %v364, %v365
        %v367 = vrot.slane %v282, 2
        %v368 = vsel %vm348, %v365, %v367
        %v377 = vmul.f32 %v249, %v351
        %v378 = vmul.f32 %v250, %v353
        %v379 = vmul.f32 %v249, %v356
        %v380 = vmul.f32 %v250, %v358
        %v381 = vmul.f32 %v249, %v361
        %v382 = vmul.f32 %v250, %v363
        %v383 = vmul.f32 %v249, %v366
        %v384 = vmul.f32 %v250, %v368
        %v385 = vadd.f32 %v340, %v377
        %v386 = vadd.f32 %v341, %v378
        %v387 = vadd.f32 %v342, %v379
        %v388 = vadd.f32 %v343, %v380
        %v389 = vadd.f32 %v344, %v381
        %v390 = vadd.f32 %v345, %v382
        %v391 = vadd.f32 %v346, %v383
        %v392 = vadd.f32 %v347, %v384
        %vm393 = vcmask 1044480
        %v394 = vrot.slane %v271, 3
        %v395 = vrot.slane %v272, 3
        %v396 = vsel %vm393, %v394, %v395
        %v397 = vrot.slane %v273, 3
        %v398 = vsel %vm393, %v395, %v397
        %v399 = vrot.slane %v274, 3
        %v400 = vrot.slane %v275, 3
        %v401 = vsel %vm393, %v399, %v400
        %v402 = vrot.slane %v276, 3
        %v403 = vsel %vm393, %v400, %v402
        %v404 = vrot.slane %v277, 3
        %v405 = vrot.slane %v278, 3
        %v406 = vsel %vm393, %v404, %v405
        %v407 = vrot.slane %v279, 3
        %v408 = vsel %vm393, %v405, %v407
        %v409 = vrot.slane %v280, 3
        %v410 = vrot.slane %v281, 3
        %v411 = vsel %vm393, %v409, %v410
        %v412 = vrot.slane %v282, 3
        %v413 = vsel %vm393, %v410, %v412
        %v422 = vmul.f32 %v252, %v396
        %v423 = vmul.f32 %v253, %v398
        %v424 = vmul.f32 %v252, %v401
        %v425 = vmul.f32 %v253, %v403
        %v426 = vmul.f32 %v252, %v406
        %v427 = vmul.f32 %v253, %v408
        %v428 = vmul.f32 %v252, %v411
        %v429 = vmul.f32 %v253, %v413
        %v430 = vadd.f32 %v385, %v422
        %v431 = vadd.f32 %v386, %v423
        %v432 = vadd.f32 %v387, %v424
        %v433 = vadd.f32 %v388, %v425
        %v434 = vadd.f32 %v389, %v426
        %v435 = vadd.f32 %v390, %v427
        %v436 = vadd.f32 %v391, %v428
        %v437 = vadd.f32 %v392, %v429
        %vm438 = vcmask 1043456
        %v439 = vrot.slane %v271, 4
        %v440 = vrot.slane %v272, 4
        %v441 = vsel %vm438, %v439, %v440
        %v442 = vrot.slane %v273, 4
        %v443 = vsel %vm438, %v440, %v442
        %v444 = vrot.slane %v274, 4
        %v445 = vrot.slane %v275, 4
        %v446 = vsel %vm438, %v444, %v445
        %v447 = vrot.slane %v276, 4
        %v448 = vsel %vm438, %v445, %v447
        %v449 = vrot.slane %v277, 4
        %v450 = vrot.slane %v278, 4
        %v451 = vsel %vm438, %v449, %v450
        %v452 = vrot.slane %v279, 4
        %v453 = vsel %vm438, %v450, %v452
        %v454 = vrot.slane %v280, 4
        %v455 = vrot.slane %v281, 4
        %v456 = vsel %vm438, %v454, %v455
        %v457 = vrot.slane %v282, 4
        %v458 = vsel %vm438, %v455, %v457
        %v467 = vmul.f32 %v255, %v441
        %v468 = vmul.f32 %v256, %v443
        %v469 = vmul.f32 %v255, %v446
        %v470 = vmul.f32 %v256, %v448
        %v471 = vmul.f32 %v255, %v451
        %v472 = vmul.f32 %v256, %v453
        %v473 = vmul.f32 %v255, %v456
        %v474 = vmul.f32 %v256, %v458
        %v475 = vadd.f32 %v430, %v467
        %v476 = vadd.f32 %v431, %v468
        %v477 = vadd.f32 %v432, %v469
        %v478 = vadd.f32 %v433, %v470
        %v479 = vadd.f32 %v434, %v471
        %v480 = vadd.f32 %v435, %v472
        %v481 = vadd.f32 %v436, %v473
        %v482 = vadd.f32 %v437, %v474
        %v483 = vmul.f32 %v257, %v475
        %v484 = vmul.f32 %v258, %v476
        %v485 = vmul.f32 %v257, %v477
        %v486 = vmul.f32 %v258, %v478
        %v487 = vmul.f32 %v257, %v479
        %v488 = vmul.f32 %v258, %v480
        %v489 = vmul.f32 %v257, %v481
        %v490 = vmul.f32 %v258, %v482
        %491 = vrot.lane.b32.xlu0 %v271, 127
        %v492 = vpop.permute.xlu0 %491
        %493 = vrot.lane.b32.xlu0 %v272, 127
        %v494 = vpop.permute.xlu0 %493
        %495 = vrot.lane.b32.xlu0 %v274, 127
        %v496 = vpop.permute.xlu0 %495
        %497 = vrot.lane.b32.xlu0 %v275, 127
        %v498 = vpop.permute.xlu0 %497
        %499 = vrot.lane.b32.xlu0 %v277, 127
        %v500 = vpop.permute.xlu0 %499
        %501 = vrot.lane.b32.xlu0 %v278, 127
        %v502 = vpop.permute.xlu0 %501
        %503 = vrot.lane.b32.xlu0 %v280, 127
        %v504 = vpop.permute.xlu0 %503
        %505 = vrot.lane.b32.xlu0 %v281, 127
        %v506 = vpop.permute.xlu0 %505
        %v515 = vmul.f32 %v243, %v492
        %v516 = vmul.f32 %v244, %v494
        %v517 = vmul.f32 %v243, %v496
        %v518 = vmul.f32 %v244, %v498
        %v519 = vmul.f32 %v243, %v500
        %v520 = vmul.f32 %v244, %v502
        %v521 = vmul.f32 %v243, %v504
        %v522 = vmul.f32 %v244, %v506
        %523 = vrot.lane.b32.xlu0 %v306, 127
        %v524 = vpop.permute.xlu0 %523
        %525 = vrot.lane.b32.xlu0 %v308, 127
        %v526 = vpop.permute.xlu0 %525
        %527 = vrot.lane.b32.xlu0 %v311, 127
        %v528 = vpop.permute.xlu0 %527
        %529 = vrot.lane.b32.xlu0 %v313, 127
        %v530 = vpop.permute.xlu0 %529
        %531 = vrot.lane.b32.xlu0 %v316, 127
        %v532 = vpop.permute.xlu0 %531
        %533 = vrot.lane.b32.xlu0 %v318, 127
        %v534 = vpop.permute.xlu0 %533
        %535 = vrot.lane.b32.xlu0 %v321, 127
        %v536 = vpop.permute.xlu0 %535
        %537 = vrot.lane.b32.xlu0 %v323, 127
        %v538 = vpop.permute.xlu0 %537
        %v547 = vmul.f32 %v246, %v524
        %v548 = vmul.f32 %v247, %v526
        %v549 = vmul.f32 %v246, %v528
        %v550 = vmul.f32 %v247, %v530
        %v551 = vmul.f32 %v246, %v532
        %v552 = vmul.f32 %v247, %v534
        %v553 = vmul.f32 %v246, %v536
        %v554 = vmul.f32 %v247, %v538
        %v555 = vadd.f32 %v515, %v547
        %v556 = vadd.f32 %v516, %v548
        %v557 = vadd.f32 %v517, %v549
        %v558 = vadd.f32 %v518, %v550
        %v559 = vadd.f32 %v519, %v551
        %v560 = vadd.f32 %v520, %v552
        %v561 = vadd.f32 %v521, %v553
        %v562 = vadd.f32 %v522, %v554
        %563 = vrot.lane.b32.xlu0 %v351, 127
        %v564 = vpop.permute.xlu0 %563
        %565 = vrot.lane.b32.xlu0 %v353, 127
        %v566 = vpop.permute.xlu0 %565
        %567 = vrot.lane.b32.xlu0 %v356, 127
        %v568 = vpop.permute.xlu0 %567
        %569 = vrot.lane.b32.xlu0 %v358, 127
        %v570 = vpop.permute.xlu0 %569
        %571 = vrot.lane.b32.xlu0 %v361, 127
        %v572 = vpop.permute.xlu0 %571
        %573 = vrot.lane.b32.xlu0 %v363, 127
        %v574 = vpop.permute.xlu0 %573
        %575 = vrot.lane.b32.xlu0 %v366, 127
        %v576 = vpop.permute.xlu0 %575
        %577 = vrot.lane.b32.xlu0 %v368, 127
        %v578 = vpop.permute.xlu0 %577
        %v587 = vmul.f32 %v249, %v564
        %v588 = vmul.f32 %v250, %v566
        %v589 = vmul.f32 %v249, %v568
        %v590 = vmul.f32 %v250, %v570
        %v591 = vmul.f32 %v249, %v572
        %v592 = vmul.f32 %v250, %v574
        %v593 = vmul.f32 %v249, %v576
        %v594 = vmul.f32 %v250, %v578
        %v595 = vadd.f32 %v555, %v587
        %v596 = vadd.f32 %v556, %v588
        %v597 = vadd.f32 %v557, %v589
        %v598 = vadd.f32 %v558, %v590
        %v599 = vadd.f32 %v559, %v591
        %v600 = vadd.f32 %v560, %v592
        %v601 = vadd.f32 %v561, %v593
        %v602 = vadd.f32 %v562, %v594
        %603 = vrot.lane.b32.xlu0 %v396, 127
        %v604 = vpop.permute.xlu0 %603
        %605 = vrot.lane.b32.xlu0 %v398, 127
        %v606 = vpop.permute.xlu0 %605
        %607 = vrot.lane.b32.xlu0 %v401, 127
        %v608 = vpop.permute.xlu0 %607
        %609 = vrot.lane.b32.xlu0 %v403, 127
        %v610 = vpop.permute.xlu0 %609
        %611 = vrot.lane.b32.xlu0 %v406, 127
        %v612 = vpop.permute.xlu0 %611
        %613 = vrot.lane.b32.xlu0 %v408, 127
        %v614 = vpop.permute.xlu0 %613
        %615 = vrot.lane.b32.xlu0 %v411, 127
        %v616 = vpop.permute.xlu0 %615
        %617 = vrot.lane.b32.xlu0 %v413, 127
        %v618 = vpop.permute.xlu0 %617
        %v627 = vmul.f32 %v252, %v604
        %v628 = vmul.f32 %v253, %v606
        %v629 = vmul.f32 %v252, %v608
        %v630 = vmul.f32 %v253, %v610
        %v631 = vmul.f32 %v252, %v612
        %v632 = vmul.f32 %v253, %v614
        %v633 = vmul.f32 %v252, %v616
        %v634 = vmul.f32 %v253, %v618
        %v635 = vadd.f32 %v595, %v627
        %v636 = vadd.f32 %v596, %v628
        %v637 = vadd.f32 %v597, %v629
        %v638 = vadd.f32 %v598, %v630
        %v639 = vadd.f32 %v599, %v631
        %v640 = vadd.f32 %v600, %v632
        %v641 = vadd.f32 %v601, %v633
        %v642 = vadd.f32 %v602, %v634
        %643 = vrot.lane.b32.xlu0 %v441, 127
        %v644 = vpop.permute.xlu0 %643
        %645 = vrot.lane.b32.xlu0 %v443, 127
        %v646 = vpop.permute.xlu0 %645
        %647 = vrot.lane.b32.xlu0 %v446, 127
        %v648 = vpop.permute.xlu0 %647
        %649 = vrot.lane.b32.xlu0 %v448, 127
        %v650 = vpop.permute.xlu0 %649
        %651 = vrot.lane.b32.xlu0 %v451, 127
        %v652 = vpop.permute.xlu0 %651
        %653 = vrot.lane.b32.xlu0 %v453, 127
        %v654 = vpop.permute.xlu0 %653
        %655 = vrot.lane.b32.xlu0 %v456, 127
        %v656 = vpop.permute.xlu0 %655
        %657 = vrot.lane.b32.xlu0 %v458, 127
        %v658 = vpop.permute.xlu0 %657
        %v667 = vmul.f32 %v255, %v644
        %v668 = vmul.f32 %v256, %v646
        %v669 = vmul.f32 %v255, %v648
        %v670 = vmul.f32 %v256, %v650
        %v671 = vmul.f32 %v255, %v652
        %v672 = vmul.f32 %v256, %v654
        %v673 = vmul.f32 %v255, %v656
        %v674 = vmul.f32 %v256, %v658
        %v675 = vadd.f32 %v635, %v667
        %v676 = vadd.f32 %v636, %v668
        %v677 = vadd.f32 %v637, %v669
        %v678 = vadd.f32 %v638, %v670
        %v679 = vadd.f32 %v639, %v671
        %v680 = vadd.f32 %v640, %v672
        %v681 = vadd.f32 %v641, %v673
        %v682 = vadd.f32 %v642, %v674
        %v683 = vmul.f32 %v260, %v675
        %v684 = vmul.f32 %v261, %v676
        %v685 = vmul.f32 %v260, %v677
        %v686 = vmul.f32 %v261, %v678
        %v687 = vmul.f32 %v260, %v679
        %v688 = vmul.f32 %v261, %v680
        %v689 = vmul.f32 %v260, %v681
        %v690 = vmul.f32 %v261, %v682
        %v691 = vadd.f32 %v483, %v683
        %v692 = vadd.f32 %v484, %v684
        %v693 = vadd.f32 %v485, %v685
        %v694 = vadd.f32 %v486, %v686
        %v695 = vadd.f32 %v487, %v687
        %v696 = vadd.f32 %v488, %v688
        %v697 = vadd.f32 %v489, %v689
        %v698 = vadd.f32 %v490, %v690
        %699 = vrot.lane.b32.xlu0 %v271, 126
        %v700 = vpop.permute.xlu0 %699
        %701 = vrot.lane.b32.xlu0 %v272, 126
        %v702 = vpop.permute.xlu0 %701
        %703 = vrot.lane.b32.xlu0 %v274, 126
        %v704 = vpop.permute.xlu0 %703
        %705 = vrot.lane.b32.xlu0 %v275, 126
        %v706 = vpop.permute.xlu0 %705
        %707 = vrot.lane.b32.xlu0 %v277, 126
        %v708 = vpop.permute.xlu0 %707
        %709 = vrot.lane.b32.xlu0 %v278, 126
        %v710 = vpop.permute.xlu0 %709
        %711 = vrot.lane.b32.xlu0 %v280, 126
        %v712 = vpop.permute.xlu0 %711
        %713 = vrot.lane.b32.xlu0 %v281, 126
        %v714 = vpop.permute.xlu0 %713
        %v723 = vmul.f32 %v243, %v700
        %v724 = vmul.f32 %v244, %v702
        %v725 = vmul.f32 %v243, %v704
        %v726 = vmul.f32 %v244, %v706
        %v727 = vmul.f32 %v243, %v708
        %v728 = vmul.f32 %v244, %v710
        %v729 = vmul.f32 %v243, %v712
        %v730 = vmul.f32 %v244, %v714
        %731 = vrot.lane.b32.xlu0 %v306, 126
        %v732 = vpop.permute.xlu0 %731
        %733 = vrot.lane.b32.xlu0 %v308, 126
        %v734 = vpop.permute.xlu0 %733
        %735 = vrot.lane.b32.xlu0 %v311, 126
        %v736 = vpop.permute.xlu0 %735
        %737 = vrot.lane.b32.xlu0 %v313, 126
        %v738 = vpop.permute.xlu0 %737
        %739 = vrot.lane.b32.xlu0 %v316, 126
        %v740 = vpop.permute.xlu0 %739
        %741 = vrot.lane.b32.xlu0 %v318, 126
        %v742 = vpop.permute.xlu0 %741
        %743 = vrot.lane.b32.xlu0 %v321, 126
        %v744 = vpop.permute.xlu0 %743
        %745 = vrot.lane.b32.xlu0 %v323, 126
        %v746 = vpop.permute.xlu0 %745
        %v755 = vmul.f32 %v246, %v732
        %v756 = vmul.f32 %v247, %v734
        %v757 = vmul.f32 %v246, %v736
        %v758 = vmul.f32 %v247, %v738
        %v759 = vmul.f32 %v246, %v740
        %v760 = vmul.f32 %v247, %v742
        %v761 = vmul.f32 %v246, %v744
        %v762 = vmul.f32 %v247, %v746
        %v763 = vadd.f32 %v723, %v755
        %v764 = vadd.f32 %v724, %v756
        %v765 = vadd.f32 %v725, %v757
        %v766 = vadd.f32 %v726, %v758
        %v767 = vadd.f32 %v727, %v759
        %v768 = vadd.f32 %v728, %v760
        %v769 = vadd.f32 %v729, %v761
        %v770 = vadd.f32 %v730, %v762
        %771 = vrot.lane.b32.xlu0 %v351, 126
        %v772 = vpop.permute.xlu0 %771
        %773 = vrot.lane.b32.xlu0 %v353, 126
        %v774 = vpop.permute.xlu0 %773
        %775 = vrot.lane.b32.xlu0 %v356, 126
        %v776 = vpop.permute.xlu0 %775
        %777 = vrot.lane.b32.xlu0 %v358, 126
        %v778 = vpop.permute.xlu0 %777
        %779 = vrot.lane.b32.xlu0 %v361, 126
        %v780 = vpop.permute.xlu0 %779
        %781 = vrot.lane.b32.xlu0 %v363, 126
        %v782 = vpop.permute.xlu0 %781
        %783 = vrot.lane.b32.xlu0 %v366, 126
        %v784 = vpop.permute.xlu0 %783
        %785 = vrot.lane.b32.xlu0 %v368, 126
        %v786 = vpop.permute.xlu0 %785
        %v795 = vmul.f32 %v249, %v772
        %v796 = vmul.f32 %v250, %v774
        %v797 = vmul.f32 %v249, %v776
        %v798 = vmul.f32 %v250, %v778
        %v799 = vmul.f32 %v249, %v780
        %v800 = vmul.f32 %v250, %v782
        %v801 = vmul.f32 %v249, %v784
        %v802 = vmul.f32 %v250, %v786
        %v803 = vadd.f32 %v763, %v795
        %v804 = vadd.f32 %v764, %v796
        %v805 = vadd.f32 %v765, %v797
        %v806 = vadd.f32 %v766, %v798
        %v807 = vadd.f32 %v767, %v799
        %v808 = vadd.f32 %v768, %v800
        %v809 = vadd.f32 %v769, %v801
        %v810 = vadd.f32 %v770, %v802
        %811 = vrot.lane.b32.xlu0 %v396, 126
        %v812 = vpop.permute.xlu0 %811
        %813 = vrot.lane.b32.xlu0 %v398, 126
        %v814 = vpop.permute.xlu0 %813
        %815 = vrot.lane.b32.xlu0 %v401, 126
        %v816 = vpop.permute.xlu0 %815
        %817 = vrot.lane.b32.xlu0 %v403, 126
        %v818 = vpop.permute.xlu0 %817
        %819 = vrot.lane.b32.xlu0 %v406, 126
        %v820 = vpop.permute.xlu0 %819
        %821 = vrot.lane.b32.xlu0 %v408, 126
        %v822 = vpop.permute.xlu0 %821
        %823 = vrot.lane.b32.xlu0 %v411, 126
        %v824 = vpop.permute.xlu0 %823
        %825 = vrot.lane.b32.xlu0 %v413, 126
        %v826 = vpop.permute.xlu0 %825
        %v835 = vmul.f32 %v252, %v812
        %v836 = vmul.f32 %v253, %v814
        %v837 = vmul.f32 %v252, %v816
        %v838 = vmul.f32 %v253, %v818
        %v839 = vmul.f32 %v252, %v820
        %v840 = vmul.f32 %v253, %v822
        %v841 = vmul.f32 %v252, %v824
        %v842 = vmul.f32 %v253, %v826
        %v843 = vadd.f32 %v803, %v835
        %v844 = vadd.f32 %v804, %v836
        %v845 = vadd.f32 %v805, %v837
        %v846 = vadd.f32 %v806, %v838
        %v847 = vadd.f32 %v807, %v839
        %v848 = vadd.f32 %v808, %v840
        %v849 = vadd.f32 %v809, %v841
        %v850 = vadd.f32 %v810, %v842
        %851 = vrot.lane.b32.xlu0 %v441, 126
        %v852 = vpop.permute.xlu0 %851
        %853 = vrot.lane.b32.xlu0 %v443, 126
        %v854 = vpop.permute.xlu0 %853
        %855 = vrot.lane.b32.xlu0 %v446, 126
        %v856 = vpop.permute.xlu0 %855
        %857 = vrot.lane.b32.xlu0 %v448, 126
        %v858 = vpop.permute.xlu0 %857
        %859 = vrot.lane.b32.xlu0 %v451, 126
        %v860 = vpop.permute.xlu0 %859
        %861 = vrot.lane.b32.xlu0 %v453, 126
        %v862 = vpop.permute.xlu0 %861
        %863 = vrot.lane.b32.xlu0 %v456, 126
        %v864 = vpop.permute.xlu0 %863
        %865 = vrot.lane.b32.xlu0 %v458, 126
        %v866 = vpop.permute.xlu0 %865
        %v875 = vmul.f32 %v255, %v852
        %v876 = vmul.f32 %v256, %v854
        %v877 = vmul.f32 %v255, %v856
        %v878 = vmul.f32 %v256, %v858
        %v879 = vmul.f32 %v255, %v860
        %v880 = vmul.f32 %v256, %v862
        %v881 = vmul.f32 %v255, %v864
        %v882 = vmul.f32 %v256, %v866
        %v883 = vadd.f32 %v843, %v875
        %v884 = vadd.f32 %v844, %v876
        %v885 = vadd.f32 %v845, %v877
        %v886 = vadd.f32 %v846, %v878
        %v887 = vadd.f32 %v847, %v879
        %v888 = vadd.f32 %v848, %v880
        %v889 = vadd.f32 %v849, %v881
        %v890 = vadd.f32 %v850, %v882
        %v891 = vmul.f32 %v263, %v883
        %v892 = vmul.f32 %v264, %v884
        %v893 = vmul.f32 %v263, %v885
        %v894 = vmul.f32 %v264, %v886
        %v895 = vmul.f32 %v263, %v887
        %v896 = vmul.f32 %v264, %v888
        %v897 = vmul.f32 %v263, %v889
        %v898 = vmul.f32 %v264, %v890
        %v899 = vadd.f32 %v691, %v891
        %v900 = vadd.f32 %v692, %v892
        %v901 = vadd.f32 %v693, %v893
        %v902 = vadd.f32 %v694, %v894
        %v903 = vadd.f32 %v695, %v895
        %v904 = vadd.f32 %v696, %v896
        %v905 = vadd.f32 %v697, %v897
        %v906 = vadd.f32 %v698, %v898
        %907 = vrot.lane.b32.xlu0 %v271, 125
        %v908 = vpop.permute.xlu0 %907
        %909 = vrot.lane.b32.xlu0 %v272, 125
        %v910 = vpop.permute.xlu0 %909
        %911 = vrot.lane.b32.xlu0 %v274, 125
        %v912 = vpop.permute.xlu0 %911
        %913 = vrot.lane.b32.xlu0 %v275, 125
        %v914 = vpop.permute.xlu0 %913
        %915 = vrot.lane.b32.xlu0 %v277, 125
        %v916 = vpop.permute.xlu0 %915
        %917 = vrot.lane.b32.xlu0 %v278, 125
        %v918 = vpop.permute.xlu0 %917
        %919 = vrot.lane.b32.xlu0 %v280, 125
        %v920 = vpop.permute.xlu0 %919
        %921 = vrot.lane.b32.xlu0 %v281, 125
        %v922 = vpop.permute.xlu0 %921
        %v931 = vmul.f32 %v243, %v908
        %v932 = vmul.f32 %v244, %v910
        %v933 = vmul.f32 %v243, %v912
        %v934 = vmul.f32 %v244, %v914
        %v935 = vmul.f32 %v243, %v916
        %v936 = vmul.f32 %v244, %v918
        %v937 = vmul.f32 %v243, %v920
        %v938 = vmul.f32 %v244, %v922
        %939 = vrot.lane.b32.xlu0 %v306, 125
        %v940 = vpop.permute.xlu0 %939
        %941 = vrot.lane.b32.xlu0 %v308, 125
        %v942 = vpop.permute.xlu0 %941
        %943 = vrot.lane.b32.xlu0 %v311, 125
        %v944 = vpop.permute.xlu0 %943
        %945 = vrot.lane.b32.xlu0 %v313, 125
        %v946 = vpop.permute.xlu0 %945
        %947 = vrot.lane.b32.xlu0 %v316, 125
        %v948 = vpop.permute.xlu0 %947
        %949 = vrot.lane.b32.xlu0 %v318, 125
        %v950 = vpop.permute.xlu0 %949
        %951 = vrot.lane.b32.xlu0 %v321, 125
        %v952 = vpop.permute.xlu0 %951
        %953 = vrot.lane.b32.xlu0 %v323, 125
        %v954 = vpop.permute.xlu0 %953
        %v963 = vmul.f32 %v246, %v940
        %v964 = vmul.f32 %v247, %v942
        %v965 = vmul.f32 %v246, %v944
        %v966 = vmul.f32 %v247, %v946
        %v967 = vmul.f32 %v246, %v948
        %v968 = vmul.f32 %v247, %v950
        %v969 = vmul.f32 %v246, %v952
        %v970 = vmul.f32 %v247, %v954
        %v971 = vadd.f32 %v931, %v963
        %v972 = vadd.f32 %v932, %v964
        %v973 = vadd.f32 %v933, %v965
        %v974 = vadd.f32 %v934, %v966
        %v975 = vadd.f32 %v935, %v967
        %v976 = vadd.f32 %v936, %v968
        %v977 = vadd.f32 %v937, %v969
        %v978 = vadd.f32 %v938, %v970
        %979 = vrot.lane.b32.xlu0 %v351, 125
        %v980 = vpop.permute.xlu0 %979
        %981 = vrot.lane.b32.xlu0 %v353, 125
        %v982 = vpop.permute.xlu0 %981
        %983 = vrot.lane.b32.xlu0 %v356, 125
        %v984 = vpop.permute.xlu0 %983
        %985 = vrot.lane.b32.xlu0 %v358, 125
        %v986 = vpop.permute.xlu0 %985
        %987 = vrot.lane.b32.xlu0 %v361, 125
        %v988 = vpop.permute.xlu0 %987
        %989 = vrot.lane.b32.xlu0 %v363, 125
        %v990 = vpop.permute.xlu0 %989
        %991 = vrot.lane.b32.xlu0 %v366, 125
        %v992 = vpop.permute.xlu0 %991
        %993 = vrot.lane.b32.xlu0 %v368, 125
        %v994 = vpop.permute.xlu0 %993
        %v1003 = vmul.f32 %v249, %v980
        %v1004 = vmul.f32 %v250, %v982
        %v1005 = vmul.f32 %v249, %v984
        %v1006 = vmul.f32 %v250, %v986
        %v1007 = vmul.f32 %v249, %v988
        %v1008 = vmul.f32 %v250, %v990
        %v1009 = vmul.f32 %v249, %v992
        %v1010 = vmul.f32 %v250, %v994
        %v1011 = vadd.f32 %v971, %v1003
        %v1012 = vadd.f32 %v972, %v1004
        %v1013 = vadd.f32 %v973, %v1005
        %v1014 = vadd.f32 %v974, %v1006
        %v1015 = vadd.f32 %v975, %v1007
        %v1016 = vadd.f32 %v976, %v1008
        %v1017 = vadd.f32 %v977, %v1009
        %v1018 = vadd.f32 %v978, %v1010
        %1019 = vrot.lane.b32.xlu0 %v396, 125
        %v1020 = vpop.permute.xlu0 %1019
        %1021 = vrot.lane.b32.xlu0 %v398, 125
        %v1022 = vpop.permute.xlu0 %1021
        %1023 = vrot.lane.b32.xlu0 %v401, 125
        %v1024 = vpop.permute.xlu0 %1023
        %1025 = vrot.lane.b32.xlu0 %v403, 125
        %v1026 = vpop.permute.xlu0 %1025
        %1027 = vrot.lane.b32.xlu0 %v406, 125
        %v1028 = vpop.permute.xlu0 %1027
        %1029 = vrot.lane.b32.xlu0 %v408, 125
        %v1030 = vpop.permute.xlu0 %1029
        %1031 = vrot.lane.b32.xlu0 %v411, 125
        %v1032 = vpop.permute.xlu0 %1031
        %1033 = vrot.lane.b32.xlu0 %v413, 125
        %v1034 = vpop.permute.xlu0 %1033
        %v1043 = vmul.f32 %v252, %v1020
        %v1044 = vmul.f32 %v253, %v1022
        %v1045 = vmul.f32 %v252, %v1024
        %v1046 = vmul.f32 %v253, %v1026
        %v1047 = vmul.f32 %v252, %v1028
        %v1048 = vmul.f32 %v253, %v1030
        %v1049 = vmul.f32 %v252, %v1032
        %v1050 = vmul.f32 %v253, %v1034
        %v1051 = vadd.f32 %v1011, %v1043
        %v1052 = vadd.f32 %v1012, %v1044
        %v1053 = vadd.f32 %v1013, %v1045
        %v1054 = vadd.f32 %v1014, %v1046
        %v1055 = vadd.f32 %v1015, %v1047
        %v1056 = vadd.f32 %v1016, %v1048
        %v1057 = vadd.f32 %v1017, %v1049
        %v1058 = vadd.f32 %v1018, %v1050
        %1059 = vrot.lane.b32.xlu0 %v441, 125
        %v1060 = vpop.permute.xlu0 %1059
        %1061 = vrot.lane.b32.xlu0 %v443, 125
        %v1062 = vpop.permute.xlu0 %1061
        %1063 = vrot.lane.b32.xlu0 %v446, 125
        %v1064 = vpop.permute.xlu0 %1063
        %1065 = vrot.lane.b32.xlu0 %v448, 125
        %v1066 = vpop.permute.xlu0 %1065
        %1067 = vrot.lane.b32.xlu0 %v451, 125
        %v1068 = vpop.permute.xlu0 %1067
        %1069 = vrot.lane.b32.xlu0 %v453, 125
        %v1070 = vpop.permute.xlu0 %1069
        %1071 = vrot.lane.b32.xlu0 %v456, 125
        %v1072 = vpop.permute.xlu0 %1071
        %1073 = vrot.lane.b32.xlu0 %v458, 125
        %v1074 = vpop.permute.xlu0 %1073
        %v1083 = vmul.f32 %v255, %v1060
        %v1084 = vmul.f32 %v256, %v1062
        %v1085 = vmul.f32 %v255, %v1064
        %v1086 = vmul.f32 %v256, %v1066
        %v1087 = vmul.f32 %v255, %v1068
        %v1088 = vmul.f32 %v256, %v1070
        %v1089 = vmul.f32 %v255, %v1072
        %v1090 = vmul.f32 %v256, %v1074
        %v1091 = vadd.f32 %v1051, %v1083
        %v1092 = vadd.f32 %v1052, %v1084
        %v1093 = vadd.f32 %v1053, %v1085
        %v1094 = vadd.f32 %v1054, %v1086
        %v1095 = vadd.f32 %v1055, %v1087
        %v1096 = vadd.f32 %v1056, %v1088
        %v1097 = vadd.f32 %v1057, %v1089
        %v1098 = vadd.f32 %v1058, %v1090
        %v1099 = vmul.f32 %v266, %v1091
        %v1100 = vmul.f32 %v267, %v1092
        %v1101 = vmul.f32 %v266, %v1093
        %v1102 = vmul.f32 %v267, %v1094
        %v1103 = vmul.f32 %v266, %v1095
        %v1104 = vmul.f32 %v267, %v1096
        %v1105 = vmul.f32 %v266, %v1097
        %v1106 = vmul.f32 %v267, %v1098
        %v1107 = vadd.f32 %v899, %v1099
        %v1108 = vadd.f32 %v900, %v1100
        %v1109 = vadd.f32 %v901, %v1101
        %v1110 = vadd.f32 %v902, %v1102
        %v1111 = vadd.f32 %v903, %v1103
        %v1112 = vadd.f32 %v904, %v1104
        %v1113 = vadd.f32 %v905, %v1105
        %v1114 = vadd.f32 %v906, %v1106
        %1115 = vrot.lane.b32.xlu0 %v271, 124
        %v1116 = vpop.permute.xlu0 %1115
        %1117 = vrot.lane.b32.xlu0 %v272, 124
        %v1118 = vpop.permute.xlu0 %1117
        %1119 = vrot.lane.b32.xlu0 %v274, 124
        %v1120 = vpop.permute.xlu0 %1119
        %1121 = vrot.lane.b32.xlu0 %v275, 124
        %v1122 = vpop.permute.xlu0 %1121
        %1123 = vrot.lane.b32.xlu0 %v277, 124
        %v1124 = vpop.permute.xlu0 %1123
        %1125 = vrot.lane.b32.xlu0 %v278, 124
        %v1126 = vpop.permute.xlu0 %1125
        %1127 = vrot.lane.b32.xlu0 %v280, 124
        %v1128 = vpop.permute.xlu0 %1127
        %1129 = vrot.lane.b32.xlu0 %v281, 124
        %v1130 = vpop.permute.xlu0 %1129
        %v1139 = vmul.f32 %v243, %v1116
        %v1140 = vmul.f32 %v244, %v1118
        %v1141 = vmul.f32 %v243, %v1120
        %v1142 = vmul.f32 %v244, %v1122
        %v1143 = vmul.f32 %v243, %v1124
        %v1144 = vmul.f32 %v244, %v1126
        %v1145 = vmul.f32 %v243, %v1128
        %v1146 = vmul.f32 %v244, %v1130
        %1147 = vrot.lane.b32.xlu0 %v306, 124
        %v1148 = vpop.permute.xlu0 %1147
        %1149 = vrot.lane.b32.xlu0 %v308, 124
        %v1150 = vpop.permute.xlu0 %1149
        %1151 = vrot.lane.b32.xlu0 %v311, 124
        %v1152 = vpop.permute.xlu0 %1151
        %1153 = vrot.lane.b32.xlu0 %v313, 124
        %v1154 = vpop.permute.xlu0 %1153
        %1155 = vrot.lane.b32.xlu0 %v316, 124
        %v1156 = vpop.permute.xlu0 %1155
        %1157 = vrot.lane.b32.xlu0 %v318, 124
        %v1158 = vpop.permute.xlu0 %1157
        %1159 = vrot.lane.b32.xlu0 %v321, 124
        %v1160 = vpop.permute.xlu0 %1159
        %1161 = vrot.lane.b32.xlu0 %v323, 124
        %v1162 = vpop.permute.xlu0 %1161
        %v1171 = vmul.f32 %v246, %v1148
        %v1172 = vmul.f32 %v247, %v1150
        %v1173 = vmul.f32 %v246, %v1152
        %v1174 = vmul.f32 %v247, %v1154
        %v1175 = vmul.f32 %v246, %v1156
        %v1176 = vmul.f32 %v247, %v1158
        %v1177 = vmul.f32 %v246, %v1160
        %v1178 = vmul.f32 %v247, %v1162
        %v1179 = vadd.f32 %v1139, %v1171
        %v1180 = vadd.f32 %v1140, %v1172
        %v1181 = vadd.f32 %v1141, %v1173
        %v1182 = vadd.f32 %v1142, %v1174
        %v1183 = vadd.f32 %v1143, %v1175
        %v1184 = vadd.f32 %v1144, %v1176
        %v1185 = vadd.f32 %v1145, %v1177
        %v1186 = vadd.f32 %v1146, %v1178
        %1187 = vrot.lane.b32.xlu0 %v351, 124
        %v1188 = vpop.permute.xlu0 %1187
        %1189 = vrot.lane.b32.xlu0 %v353, 124
        %v1190 = vpop.permute.xlu0 %1189
        %1191 = vrot.lane.b32.xlu0 %v356, 124
        %v1192 = vpop.permute.xlu0 %1191
        %1193 = vrot.lane.b32.xlu0 %v358, 124
        %v1194 = vpop.permute.xlu0 %1193
        %1195 = vrot.lane.b32.xlu0 %v361, 124
        %v1196 = vpop.permute.xlu0 %1195
        %1197 = vrot.lane.b32.xlu0 %v363, 124
        %v1198 = vpop.permute.xlu0 %1197
        %1199 = vrot.lane.b32.xlu0 %v366, 124
        %v1200 = vpop.permute.xlu0 %1199
        %1201 = vrot.lane.b32.xlu0 %v368, 124
        %v1202 = vpop.permute.xlu0 %1201
        %v1211 = vmul.f32 %v249, %v1188
        %v1212 = vmul.f32 %v250, %v1190
        %v1213 = vmul.f32 %v249, %v1192
        %v1214 = vmul.f32 %v250, %v1194
        %v1215 = vmul.f32 %v249, %v1196
        %v1216 = vmul.f32 %v250, %v1198
        %v1217 = vmul.f32 %v249, %v1200
        %v1218 = vmul.f32 %v250, %v1202
        %v1219 = vadd.f32 %v1179, %v1211
        %v1220 = vadd.f32 %v1180, %v1212
        %v1221 = vadd.f32 %v1181, %v1213
        %v1222 = vadd.f32 %v1182, %v1214
        %v1223 = vadd.f32 %v1183, %v1215
        %v1224 = vadd.f32 %v1184, %v1216
        %v1225 = vadd.f32 %v1185, %v1217
        %v1226 = vadd.f32 %v1186, %v1218
        %1227 = vrot.lane.b32.xlu0 %v396, 124
        %v1228 = vpop.permute.xlu0 %1227
        %1229 = vrot.lane.b32.xlu0 %v398, 124
        %v1230 = vpop.permute.xlu0 %1229
        %1231 = vrot.lane.b32.xlu0 %v401, 124
        %v1232 = vpop.permute.xlu0 %1231
        %1233 = vrot.lane.b32.xlu0 %v403, 124
        %v1234 = vpop.permute.xlu0 %1233
        %1235 = vrot.lane.b32.xlu0 %v406, 124
        %v1236 = vpop.permute.xlu0 %1235
        %1237 = vrot.lane.b32.xlu0 %v408, 124
        %v1238 = vpop.permute.xlu0 %1237
        %1239 = vrot.lane.b32.xlu0 %v411, 124
        %v1240 = vpop.permute.xlu0 %1239
        %1241 = vrot.lane.b32.xlu0 %v413, 124
        %v1242 = vpop.permute.xlu0 %1241
        %v1251 = vmul.f32 %v252, %v1228
        %v1252 = vmul.f32 %v253, %v1230
        %v1253 = vmul.f32 %v252, %v1232
        %v1254 = vmul.f32 %v253, %v1234
        %v1255 = vmul.f32 %v252, %v1236
        %v1256 = vmul.f32 %v253, %v1238
        %v1257 = vmul.f32 %v252, %v1240
        %v1258 = vmul.f32 %v253, %v1242
        %v1259 = vadd.f32 %v1219, %v1251
        %v1260 = vadd.f32 %v1220, %v1252
        %v1261 = vadd.f32 %v1221, %v1253
        %v1262 = vadd.f32 %v1222, %v1254
        %v1263 = vadd.f32 %v1223, %v1255
        %v1264 = vadd.f32 %v1224, %v1256
        %v1265 = vadd.f32 %v1225, %v1257
        %v1266 = vadd.f32 %v1226, %v1258
        %1267 = vrot.lane.b32.xlu0 %v441, 124
        %v1268 = vpop.permute.xlu0 %1267
        %1269 = vrot.lane.b32.xlu0 %v443, 124
        %v1270 = vpop.permute.xlu0 %1269
        %1271 = vrot.lane.b32.xlu0 %v446, 124
        %v1272 = vpop.permute.xlu0 %1271
        %1273 = vrot.lane.b32.xlu0 %v448, 124
        %v1274 = vpop.permute.xlu0 %1273
        %1275 = vrot.lane.b32.xlu0 %v451, 124
        %v1276 = vpop.permute.xlu0 %1275
        %1277 = vrot.lane.b32.xlu0 %v453, 124
        %v1278 = vpop.permute.xlu0 %1277
        %1279 = vrot.lane.b32.xlu0 %v456, 124
        %v1280 = vpop.permute.xlu0 %1279
        %1281 = vrot.lane.b32.xlu0 %v458, 124
        %v1282 = vpop.permute.xlu0 %1281
        %v1291 = vmul.f32 %v255, %v1268
        %v1292 = vmul.f32 %v256, %v1270
        %v1293 = vmul.f32 %v255, %v1272
        %v1294 = vmul.f32 %v256, %v1274
        %v1295 = vmul.f32 %v255, %v1276
        %v1296 = vmul.f32 %v256, %v1278
        %v1297 = vmul.f32 %v255, %v1280
        %v1298 = vmul.f32 %v256, %v1282
        %v1299 = vadd.f32 %v1259, %v1291
        %v1300 = vadd.f32 %v1260, %v1292
        %v1301 = vadd.f32 %v1261, %v1293
        %v1302 = vadd.f32 %v1262, %v1294
        %v1303 = vadd.f32 %v1263, %v1295
        %v1304 = vadd.f32 %v1264, %v1296
        %v1305 = vadd.f32 %v1265, %v1297
        %v1306 = vadd.f32 %v1266, %v1298
        %v1307 = vmul.f32 %v269, %v1299
        %v1308 = vmul.f32 %v270, %v1300
        %v1309 = vmul.f32 %v269, %v1301
        %v1310 = vmul.f32 %v270, %v1302
        %v1311 = vmul.f32 %v269, %v1303
        %v1312 = vmul.f32 %v270, %v1304
        %v1313 = vmul.f32 %v269, %v1305
        %v1314 = vmul.f32 %v270, %v1306
        %v1315 = vadd.f32 %v1107, %v1307
        %v1316 = vadd.f32 %v1108, %v1308
        %v1317 = vadd.f32 %v1109, %v1309
        %v1318 = vadd.f32 %v1110, %v1310
        %v1319 = vadd.f32 %v1111, %v1311
        %v1320 = vadd.f32 %v1112, %v1312
        %v1321 = vadd.f32 %v1113, %v1313
        %v1322 = vadd.f32 %v1114, %v1314
        %vm1323 = vcmask 130048
        %1324 = vst.msk [vmem:[%s220] sm:$0xff] %vm1323, %v1315
        %1325 = vst.msk [vmem:[%s220 + $0x8] sm:$0xff] %vm1323, %v1316
        %1326 = vst.msk [vmem:[%s220 + $0x10] sm:$0xff] %vm1323, %v1317
        %1327 = vst.msk [vmem:[%s220 + $0x18] sm:$0xff] %vm1323, %v1318
        %1328 = vst.msk [vmem:[%s220 + $0x20] sm:$0xff] %vm1323, %v1319
        %1329 = vst.msk [vmem:[%s220 + $0x28] sm:$0xff] %vm1323, %v1320
        %1330 = vst.msk [vmem:[%s220 + $0x30] sm:$0xff] %vm1323, %v1321
        %1331 = vst.msk [vmem:[%s220 + $0x38] sm:$0xff] %vm1323, %v1322
        %s1332 = sand.u32 %s119, 1
        %s1333 = scalar_lea.sflag [#allocation3], %s1332
        %s1334 = sand.u32 %s119, 1
        %s1335 = smul.addr %s1334, 64
        %s1336 = scalar_lea.vmem [#allocation2], %s1335
        // Predicated region
        $region33: #{tpu_custom_call.1} parent=31 // pred_check
          %p1337 = pneg %p129
        $region34: #{tpu_custom_call.1} parent=31 // pred_check_branch
          %1339 = sbr.rel (%p1337) target = $region36
        $region35: #{tpu_custom_call.1} parent=31 // pred_region
          %s1340 = smul.u32 4, %s22
          %s1342 = ssub.s32 1024, 1024
          %1343 = vsyncadd %s1333, %s1342
          %s1344 = smul.addr %s1340, 2
          %s1345 = smul.addr %s21, 8
          %s1346 = sadd.s32 %s1344, %s1345
          %s1347 = smul.addr %s1346, 128
          %s1348 = scalar_lea.hbm %s3, %s1347
          %s1349 = sshll.u32 %s1336, 4
          %s1350 = int_to_ptr.vmem [resolvable:$true] %s1349
          %1355 = dma.vmem_to_hbm [thread:$0]  %s1350, 1024, %s1348, %s1333, 128, 128, 8
        $region36: #{tpu_custom_call.1} parent=31 // pred_fallthru
          _
      $region32: #{tpu_custom_call.1} parent=5 // pred_fallthru
        _
      %p1356 = scmp.le.s32.totalorder 2, %s12
      // Predicated region
      $region37: #{tpu_custom_call.1} parent=5 // pred_check
        %p1357 = pneg %p1356
      $region38: #{tpu_custom_call.1} parent=5 // pred_check_branch
        %1359 = sbr.rel (%p1357) target = $region40
      $region39: #{tpu_custom_call.1} parent=5 // pred_region
        %s1360 = ssub.s32 %s12, 2
        // Predicated region
        $region41: #{tpu_custom_call.1} parent=39 // pred_check
          %p1361 = pneg %p135
        $region42: #{tpu_custom_call.1} parent=39 // pred_check_branch
          %1363 = sbr.rel (%p1361) target = $region44
        $region43: #{tpu_custom_call.1} parent=39 // pred_region
          %s1364 = sand.u32 %s120, 1
          %s1365 = scalar_lea.sflag [#allocation3], %s1364
          %s1366 = sand.u32 %s120, 1
          %s1367 = smul.addr %s1366, 64
          %s1368 = scalar_lea.vmem [#allocation2], %s1367
          %1369 = dma.done %s1365, 1024
        $region44: #{tpu_custom_call.1} parent=39 // pred_fallthru
          _
      $region40: #{tpu_custom_call.1} parent=5 // pred_fallthru
        _
    $region6: #{tpu_custom_call.1} parent=1 // loop_footer
      %s16 = sadd.s32 1, %s12
    $region7: #{tpu_custom_call.1} parent=1 // loop_footer_branch
      %11 = sbr.rel target = $region3
    $region8: #{tpu_custom_call.1} parent=1 // loop_exit
      _
    %1370 = vsyncpa [#allocation3], 1
    %s1371 = scalar_lea.sflag [#allocation3], 1
    %1372 = vsyncpa %s1371, 1

</llo_original>
